<compile_context>
chip_gen: v7x
topology: tpu7x:2x2x1
jax: 0.10.0
libtpu: 0.0.40
codegen_flags: <defaults>
</compile_context>

<pallas_src>
import jax
import jax.numpy as jnp
from jax.experimental import pallas as pl
from jax.experimental.pallas import tpu as pltpu


# ----------------------------------------------------------------------------
# Kernel body
# ----------------------------------------------------------------------------
def add_nets_kernel(x_ref, w_ref, b_ref, o_ref, acc_ref):
    k = pl.program_id(2)

    @pl.when(k == 0)
    def _():
        # Init the f32 accumulator with the (1, tn) bias broadcast over rows:
        # replaces the zero-fill store and removes the final bias add.
        acc_ref[...] = jnp.broadcast_to(b_ref[...], acc_ref.shape)

    # Fused matmul on the MXU, f32 accumulation.
    acc_ref[...] += jnp.dot(
        x_ref[...], w_ref[...], preferred_element_type=jnp.float32
    )

    @pl.when(k == pl.num_programs(2) - 1)
    def _():
        o_ref[...] = acc_ref[...].astype(o_ref.dtype)


# ----------------------------------------------------------------------------
# Parameter fusion (do this ONCE, at parameter-load time, not per call)
# ----------------------------------------------------------------------------
def fuse_add_nets_params(w1, b1, w2, b2, compute_dtype=None):
    """Fuse the two Linear layers.  w1, w2: (K, N) (pre-transposed), b: (N,)
    or (1, N).  Returns (w_sum, b_sum); b_sum stays f32 (accumulator dtype)."""
    w_sum = w1 + w2
    b_sum = (jnp.reshape(b1, (1, -1)) + jnp.reshape(b2, (1, -1))).astype(
        jnp.float32
    )
    if compute_dtype is not None:
        w_sum = w_sum.astype(compute_dtype)
    return w_sum, b_sum


# ----------------------------------------------------------------------------
# Tiling helpers
# ----------------------------------------------------------------------------
def _choose_tile(dim, target, align):
    """Full extent for small dims (always a legal block); otherwise the
    largest aligned tile <= target (dim is then padded to a multiple)."""
    if dim <= target:
        return dim
    return max((target // align) * align, align)


def _pad_axis(arr, axis, mult):
    size = arr.shape[axis]
    pad = (-size) % mult
    if pad == 0:
        return arr
    widths = [(0, 0)] * arr.ndim
    widths[axis] = (0, pad)
    return jnp.pad(arr, widths)


def _ensure_two_parallel_blocks(m_pad, n_pad, tm, tn, m_align):
    """Make (M//tm)*(N//tn) >= 2 when possible so both v7x TCs get work.
    Prefer splitting N; blocks stay aligned and still divide the padded dims."""
    while (m_pad // tm) * (n_pad // tn) < 2:
        if tn > 128 and (tn // 2) % 128 == 0 and n_pad % (tn // 2) == 0:
            tn //= 2
        elif tm > m_align and (tm // 2) % m_align == 0 and m_pad % (tm // 2) == 0:
            tm //= 2
        else:
            break
    return tm, tn


# ----------------------------------------------------------------------------
# Forward with pre-fused parameters (the fast, per-call path)
# ----------------------------------------------------------------------------
def add_nets_fused(x, w_sum, b_sum, *, tm=512, tn=512, tk=512, out_dtype=None):
    """x: (..., K); w_sum: (K, N); b_sum: (1, N) f32."""
    lead_shape = x.shape[:-1]
    K = x.shape[-1]
    Kw, N = w_sum.shape
    assert K == Kw, "x / w_sum contraction-dim mismatch"

    # Compute dtype follows the fused weights (bf16 = production path).
    if x.dtype != w_sum.dtype:
        x = x.astype(w_sum.dtype)
    if out_dtype is None:
        out_dtype = w_sum.dtype  # bf16 compute -> bf16 writeback (half HBM)

    x2 = x.reshape(-1, K)
    M = x2.shape[0]

    # bf16 packs two rows per sublane -> 16-row alignment on the M axis.
    m_align = 16 if jnp.dtype(w_sum.dtype) == jnp.dtype(jnp.bfloat16) else 8

    tm = _choose_tile(M, tm, m_align)
    tn = _choose_tile(N, tn, 128)   # 512 default: 256-aligned for v6e/v7x MXU
    tk = _choose_tile(K, tk, 128)

    # Zero-pad awkward dims to tile multiples (zeros are exact for matmul and
    # the padded output region is sliced away).  Small dims use full-extent
    # blocks and need no padding.
    x2 = _pad_axis(_pad_axis(x2, 0, tm), 1, tk)
    w_p = _pad_axis(_pad_axis(w_sum, 0, tk), 1, tn)
    b_p = _pad_axis(b_sum, 1, tn)
    Mp, Kp = x2.shape
    Np = w_p.shape[1]

    tm, tn = _ensure_two_parallel_blocks(Mp, Np, tm, tn, m_align)

    grid = (Mp // tm, Np // tn, Kp // tk)

    # Explicit VMEM budget (double-buffered inputs/outputs + accumulator),
    # kept well under v7x's 64 MiB physical / v5e's 16 MiB scoped default.
    in_bytes = jnp.dtype(w_sum.dtype).itemsize
    out_bytes = jnp.dtype(out_dtype).itemsize
    vmem_est = (
        2 * (tm * tk * in_bytes + tk * tn * in_bytes + tn * 4 + tm * tn * out_bytes)
        + tm * tn * 4
    )
    vmem_limit = int(min(max(2 * vmem_est, 16 << 20), 64 << 20))

    cost = pl.CostEstimate(
        flops=2 * M * N * K,
        transcendentals=0,
        bytes_accessed=(M * K + K * N) * in_bytes + N * 4 + M * N * out_bytes,
    )

    out = pl.pallas_call(
        add_nets_kernel,
        out_shape=jax.ShapeDtypeStruct((Mp, Np), out_dtype),
        grid_spec=pltpu.PrefetchScalarGridSpec(
            num_scalar_prefetch=0,
            grid=grid,
            in_specs=[
                pl.BlockSpec((tm, tk), lambda i, j, k: (i, k)),  # x tile
                pl.BlockSpec((tk, tn), lambda i, j, k: (k, j)),  # fused W tile
                pl.BlockSpec((1, tn), lambda i, j, k: (0, j)),   # fused bias
            ],
            out_specs=pl.BlockSpec((tm, tn), lambda i, j, k: (i, j)),
            scratch_shapes=[pltpu.VMEM((tm, tn), jnp.float32)],  # accumulator
        ),
        compiler_params=pltpu.CompilerParams(
            dimension_semantics=("parallel", "parallel", "arbitrary"),
            vmem_limit_bytes=vmem_limit,
        ),
        cost_estimate=cost,
    )(x2, w_p, b_p)

    out = out[:M, :N]
    return out.reshape(lead_shape + (N,))


# ----------------------------------------------------------------------------
# Convenience one-shot wrapper (fuses params inline; prefer caching the fused
# params via fuse_add_nets_params in real use).
# ----------------------------------------------------------------------------
def add_nets(x, w1, b1, w2, b2, *, compute_dtype=None, **kw):
    w_sum, b_sum = fuse_add_nets_params(w1, b1, w2, b2, compute_dtype)
    return add_nets_fused(x, w_sum, b_sum, **kw)


if __name__ == "__main__":
    # Small shapes consistent with the module: batch=2, seq=8, hidden=32.
    batch, seq, hidden = 2, 8, 32

    key = jax.random.PRNGKey(0)
    kx, kw1, kb1, kw2, kb2 = jax.random.split(key, 5)

    x = jax.random.normal(kx, (batch, seq, hidden), dtype=jnp.float32)
    # Deterministic "Linear" parameters, stored pre-transposed as (K, N).
    w1 = jax.random.normal(kw1, (hidden, hidden), dtype=jnp.float32) * 0.05
    b1 = jax.random.normal(kb1, (hidden,), dtype=jnp.float32) * 0.05
    w2 = jax.random.normal(kw2, (hidden, hidden), dtype=jnp.float32) * 0.05
    b2 = jax.random.normal(kb2, (hidden,), dtype=jnp.float32) * 0.05

    # Pure-JAX reference of AddNets.forward with two Linear sub-nets.
    ref = (x @ w1 + b1) + (x @ w2 + b2)

    # 1) f32 path: tight correctness check at toy shapes.
    w_sum, b_sum = fuse_add_nets_params(w1, b1, w2, b2)       # fused once
    out = jax.block_until_ready(add_nets_fused(x, w_sum, b_sum))
    assert out.shape == ref.shape
    assert jnp.allclose(out, ref, atol=1e-5, rtol=1e-5)

    # 2) bf16 production path: bf16 compute + bf16 writeback, f32 accumulate.
    w_bf, b_bf = fuse_add_nets_params(w1, b1, w2, b2, compute_dtype=jnp.bfloat16)
    out_bf = jax.block_until_ready(add_nets_fused(x, w_bf, b_bf))
    assert out_bf.dtype == jnp.bfloat16
    assert jnp.allclose(out_bf.astype(jnp.float32), ref, atol=5e-2, rtol=5e-2)

    print("KERNEL_OK")
</pallas_src>

<mosaic_0001>
module attributes {stable_mosaic.version = 11 : i64} {
  func.func @add_nets_kernel(%arg0: i32, %arg1: i32, %arg2: i32, %arg3: memref<8x32xf32, #tpu.memory_space<vmem>>, %arg4: memref<32x32xf32, #tpu.memory_space<vmem>>, %arg5: memref<1x32xf32, #tpu.memory_space<vmem>>, %arg6: memref<8x32xf32, #tpu.memory_space<vmem>>, %arg7: memref<8x32xf32, #tpu.memory_space<vmem>>) attributes {dimension_semantics = [#tpu.dimension_semantics<parallel>, #tpu.dimension_semantics<parallel>, #tpu.dimension_semantics<arbitrary>], iteration_bounds = array<i64: 2, 1, 1>, scalar_prefetch = 0 : i64, scratch_operands = 1 : i64, tpu.core_type = #tpu.core_type<tc>, window_params = [{transform_indices = @transform_0, window_bounds = array<i64: 8, 32>}, {transform_indices = @transform_1, window_bounds = array<i64: 32, 32>}, {transform_indices = @transform_2, window_bounds = array<i64: 1, 32>}, {transform_indices = @transform_3, window_bounds = array<i64: 8, 32>}]} {
    %c0_i32 = arith.constant 0 : i32
    %0 = arith.cmpi eq, %arg2, %c0_i32 : i32
    %1 = arith.extui %0 : i1 to i32
    %c0_i32_0 = arith.constant 0 : i32
    %2 = arith.cmpi ne, %1, %c0_i32_0 : i32
    scf.if %2 {
      %c0_10 = arith.constant 0 : index
      %c0_11 = arith.constant 0 : index
      %12 = vector.load %arg5[%c0_10, %c0_11] : memref<1x32xf32, #tpu.memory_space<vmem>>, vector<1x32xf32>
      %13 = vector.shape_cast %12 : vector<1x32xf32> to vector<1x32xf32>
      %14 = vector.broadcast %13 : vector<1x32xf32> to vector<8x32xf32>
      %c0_12 = arith.constant 0 : index
      %c0_13 = arith.constant 0 : index
      %15 = vector.load %arg7[%c0_12, %c0_13] : memref<8x32xf32, #tpu.memory_space<vmem>>, vector<8x32xf32>
      tpu.vector_store %arg7[%c0_12, %c0_13], %14 {strides = array<i32>} : memref<8x32xf32, #tpu.memory_space<vmem>>, vector<8x32xf32>,
    } else {
    }
    %c0 = arith.constant 0 : index
    %c0_1 = arith.constant 0 : index
    %3 = vector.load %arg7[%c0, %c0_1] : memref<8x32xf32, #tpu.memory_space<vmem>>, vector<8x32xf32>
    %c0_2 = arith.constant 0 : index
    %c0_3 = arith.constant 0 : index
    %4 = vector.load %arg3[%c0_2, %c0_3] : memref<8x32xf32, #tpu.memory_space<vmem>>, vector<8x32xf32>
    %c0_4 = arith.constant 0 : index
    %c0_5 = arith.constant 0 : index
    %5 = vector.load %arg4[%c0_4, %c0_5] : memref<32x32xf32, #tpu.memory_space<vmem>>, vector<32x32xf32>
    %cst = arith.constant dense<0.000000e+00> : vector<8x32xf32>
    %6 = tpu.matmul %4, %5, %cst {dimension_numbers = #tpu.dot_dimension_numbers<[1], [0], [0], [1], [0, 0, 1, 1], [], []>} : vector<8x32xf32>, vector<32x32xf32>, vector<8x32xf32> -> vector<8x32xf32>
    %7 = arith.addf %3, %6 : vector<8x32xf32>
    %c0_6 = arith.constant 0 : index
    %c0_7 = arith.constant 0 : index
    %8 = vector.load %arg7[%c0_6, %c0_7] : memref<8x32xf32, #tpu.memory_space<vmem>>, vector<8x32xf32>
    tpu.vector_store %arg7[%c0_6, %c0_7], %7 {strides = array<i32>} : memref<8x32xf32, #tpu.memory_space<vmem>>, vector<8x32xf32>,
    %c0_i32_8 = arith.constant 0 : i32
    %9 = arith.cmpi eq, %arg2, %c0_i32_8 : i32
    %10 = arith.extui %9 : i1 to i32
    %c0_i32_9 = arith.constant 0 : i32
    %11 = arith.cmpi ne, %10, %c0_i32_9 : i32
    scf.if %11 {
      %c0_10 = arith.constant 0 : index
      %c0_11 = arith.constant 0 : index
      %12 = vector.load %arg7[%c0_10, %c0_11] : memref<8x32xf32, #tpu.memory_space<vmem>>, vector<8x32xf32>
      %c0_12 = arith.constant 0 : index
      %c0_13 = arith.constant 0 : index
      %13 = vector.load %arg6[%c0_12, %c0_13] : memref<8x32xf32, #tpu.memory_space<vmem>>, vector<8x32xf32>
      tpu.vector_store %arg6[%c0_12, %c0_13], %12 {strides = array<i32>} : memref<8x32xf32, #tpu.memory_space<vmem>>, vector<8x32xf32>,
    } else {
    }
    return
  }
  func.func @transform_0(%arg0: i32, %arg1: i32, %arg2: i32) -> (i32, i32) {
    %c0_i32 = arith.constant 0 : i32
    return %arg0, %arg2 : i32, i32
  }
  func.func @transform_1(%arg0: i32, %arg1: i32, %arg2: i32) -> (i32, i32) {
    %c0_i32 = arith.constant 0 : i32
    return %arg2, %arg1 : i32, i32
  }
  func.func @transform_2(%arg0: i32, %arg1: i32, %arg2: i32) -> (i32, i32) {
    %c0_i32 = arith.constant 0 : i32
    %c0_i32_0 = arith.constant 0 : i32
    return %c0_i32, %arg1 : i32, i32
  }
  func.func @transform_3(%arg0: i32, %arg1: i32, %arg2: i32) -> (i32, i32) {
    %c0_i32 = arith.constant 0 : i32
    return %arg0, %arg1 : i32, i32
  }
}

</mosaic_0001>

<llo_original>
// kernel: tpu_custom_call.1
$region0: #{tpu_custom_call.1}
  #allocation0 [shape = 'u32[]', space=smem, size = 0x4, offset = 0x4, fixed_abs, tag = 'smem constant byte address 0x4 - core index']
  #allocation1 [shape = 'u32[144,128]{1,0:T(1,128)}', space=vmem, size = 0x12000, scoped, tag = 'internal scratch']
  #allocation2 [shape = 'f32[8,32]{1,0:T(8,128)}', space=vmem, size = 0x1000, scoped, tag = 'scratch operand']
  %s0 = inlined_call_operand.hbm [shape: f32[16,32], index: 0, kind: input, shape index: {}]
  %s1 = inlined_call_operand.hbm [shape: f32[32,32], index: 1, kind: input, shape index: {}]
  %s2 = inlined_call_operand.vmem [shape: f32[1,32], index: 2, kind: input, shape index: {}]
  %s3 = inlined_call_operand.hbm [shape: f32[16,32], index: 3, kind: output, shape index: {}]
  %s4 = sld [smem:[#allocation0]]
  $region61: #{tpu_custom_call.1} parent=0
    _
  %s6 = ssub.s32 1, %s4
  %s7 = scalar_select 0, %s6, %s4
  $region1: #{tpu_custom_call.1} parent=0
    #allocation3 [shape = 'u8[8192]{0}', space=vmem, size = 0x2000, scoped, tag = 'input window, operand 0']
    #allocation4 [shape = 's32[2]{0}', space=sflag, size = 0x8, scoped, tag = 'scoped memory for tpu_custom_call.1']
    #allocation5 [shape = 's32[2]{0}', space=sflag, size = 0x8, scoped, tag = 'scoped memory for tpu_custom_call.1']
    #allocation6 [shape = 'u8[16384]{0}', space=vmem, size = 0x4000, scoped, tag = 'input window, operand 1, single buffered']
    #allocation7 [shape = 's32[1]{0}', space=sflag, size = 0x4, scoped, tag = 'scoped memory for tpu_custom_call.1']
    #allocation8 [shape = 'u8[8192]{0}', space=vmem, size = 0x2000, scoped, tag = 'output window, operand 0']
    %8 = vsyncpa [#allocation4], 0
    %s9 = scalar_lea.sflag [#allocation4], 1
    %10 = vsyncpa %s9, 0
    %11 = vsyncpa [#allocation7], 0
    %12 = vsyncpa [#allocation5], 0
    %s13 = scalar_lea.sflag [#allocation5], 1
    %14 = vsyncpa %s13, 0
    loop: start=0, step=1, limit=4
    $region2: #{tpu_custom_call.1} parent=1 // loop_pre_header
      _
    $region3: #{tpu_custom_call.1} parent=1 // loop_header
      %s16 = sphi 0, %s20
      %p17 = scmp.ge.s32.totalorder %s16, 4
      %s23 = sphi 0, %s42
      %s24 = sphi 0, %s38
      %s25 = sphi 0, %s34
      %s26 = sphi 0, %s23
      %s27 = sphi 0, %s24
      %s28 = sphi 0, %s25
      %s29 = sphi 0, %s26
      %s30 = sphi 0, %s27
      %s31 = sphi 0, %s28
      %s47 = sphi 0, %s49
      %s50 = sphi 0, %s47
      %s51 = sphi 0, %s50
      %s67 = sphi 0, %s51
      %s75 = sphi 0, %s77
      %s78 = sphi 0, %s75
      %s79 = sphi 0, %s78
      %s95 = sphi 0, %s79
      %s101 = sphi 0, %s103
      %s104 = sphi 0, %s101
      %s105 = sphi 0, %s104
      %s121 = sphi 0, %s105
      %s129 = sphi 0, %s131
      %s132 = sphi 0, %s129
      %s133 = sphi 0, %s132
      %s149 = sphi 0, %s133
    $region4: #{tpu_custom_call.1} parent=1 // loop_header_branch
      %19 = sbr.rel (%p17) target = $region8
    $region5: #{tpu_custom_call.1} parent=1 // loop_body
      %s21 = ssub.s32 %s16, 1
      %s22 = ssub.s32 %s16, 2
      %s32 = sadd.s32 1, %s25
      %p33 = scmp.ge.s32.totalorder %s32, 1
      %s34 = scalar_select %p33, 0, %s32
      %s35 = sadd.s32 1, %s24
      %s36 = scalar_select %p33, %s35, %s24
      %p37 = scmp.ge.s32.totalorder %s36, 1
      %s38 = scalar_select %p37, 0, %s36
      %s39 = sadd.s32 1, %s23
      %s40 = scalar_select %p37, %s39, %s23
      %p41 = scmp.ge.s32.totalorder %s40, 2
      %s42 = scalar_select %p41, 0, %s40
      %s43 = ssub.s32 %s23, %s42
      %s44 = ssub.s32 %s25, %s34
      %s45 = sor.u32 %s43, %s44
      %p46 = scmp.eq.s32.totalorder %s45, 0
      %s48 = sadd.s32 %s47, 1
      %s49 = scalar_select %p46, %s47, %s48
      %p52 = pneg %p46
      %p53 = scmp.eq.s32.totalorder %s16, 1
      %p54 = por %p52, %p53
      %p55 = scmp.ne.s32.totalorder %s47, %s50
      %p56 = scmp.eq.s32.totalorder %s16, 0
      %p57 = por %p55, %p56
      %p58 = scmp.ne.s32.totalorder %s47, %s50
      %p59 = scmp.eq.s32.totalorder %s21, 1
      %p60 = por %p58, %p59
      %p61 = scmp.ne.s32.totalorder %s50, %s51
      %p62 = scmp.eq.s32.totalorder %s21, 0
      %p63 = por %p61, %p62
      %p64 = scmp.ne.s32.totalorder %s50, %s51
      %p65 = scmp.eq.s32.totalorder %s22, 1
      %p66 = por %p64, %p65
      %p68 = scmp.ne.s32.totalorder %s51, %s67
      %p69 = scmp.eq.s32.totalorder %s22, 0
      %p70 = por %p68, %p69
      %s71 = ssub.s32 %s25, %s34
      %s72 = ssub.s32 %s24, %s38
      %s73 = sor.u32 %s71, %s72
      %p74 = scmp.eq.s32.totalorder %s73, 0
      %s76 = sadd.s32 %s75, 1
      %s77 = scalar_select %p74, %s75, %s76
      %p80 = pneg %p74
      %p81 = scmp.eq.s32.totalorder %s16, 1
      %p82 = por %p80, %p81
      %p83 = scmp.ne.s32.totalorder %s75, %s78
      %p84 = scmp.eq.s32.totalorder %s16, 0
      %p85 = por %p83, %p84
      %p86 = scmp.ne.s32.totalorder %s75, %s78
      %p87 = scmp.eq.s32.totalorder %s21, 1
      %p88 = por %p86, %p87
      %p89 = scmp.ne.s32.totalorder %s78, %s79
      %p90 = scmp.eq.s32.totalorder %s21, 0
      %p91 = por %p89, %p90
      %p92 = scmp.ne.s32.totalorder %s78, %s79
      %p93 = scmp.eq.s32.totalorder %s22, 1
      %p94 = por %p92, %p93
      %p96 = scmp.ne.s32.totalorder %s79, %s95
      %p97 = scmp.eq.s32.totalorder %s22, 0
      %p98 = por %p96, %p97
      %s99 = ssub.s32 %s24, %s38
      %p100 = scmp.eq.s32.totalorder %s99, 0
      %s102 = sadd.s32 %s101, 1
      %s103 = scalar_select %p100, %s101, %s102
      %p106 = pneg %p100
      %p107 = scmp.eq.s32.totalorder %s16, 1
      %p108 = por %p106, %p107
      %p109 = scmp.ne.s32.totalorder %s101, %s104
      %p110 = scmp.eq.s32.totalorder %s16, 0
      %p111 = por %p109, %p110
      %p112 = scmp.ne.s32.totalorder %s101, %s104
      %p113 = scmp.eq.s32.totalorder %s21, 1
      %p114 = por %p112, %p113
      %p115 = scmp.ne.s32.totalorder %s104, %s105
      %p116 = scmp.eq.s32.totalorder %s21, 0
      %p117 = por %p115, %p116
      %p118 = scmp.ne.s32.totalorder %s104, %s105
      %p119 = scmp.eq.s32.totalorder %s22, 1
      %p120 = por %p118, %p119
      %p122 = scmp.ne.s32.totalorder %s105, %s121
      %p123 = scmp.eq.s32.totalorder %s22, 0
      %p124 = por %p122, %p123
      %s125 = ssub.s32 %s23, %s42
      %s126 = ssub.s32 %s24, %s38
      %s127 = sor.u32 %s125, %s126
      %p128 = scmp.eq.s32.totalorder %s127, 0
      %s130 = sadd.s32 %s129, 1
      %s131 = scalar_select %p128, %s129, %s130
      %p134 = pneg %p128
      %p135 = scmp.eq.s32.totalorder %s16, 1
      %p136 = por %p134, %p135
      %p137 = scmp.ne.s32.totalorder %s129, %s132
      %p138 = scmp.eq.s32.totalorder %s16, 0
      %p139 = por %p137, %p138
      %p140 = scmp.ne.s32.totalorder %s129, %s132
      %p141 = scmp.eq.s32.totalorder %s21, 1
      %p142 = por %p140, %p141
      %p143 = scmp.ne.s32.totalorder %s132, %s133
      %p144 = scmp.eq.s32.totalorder %s21, 0
      %p145 = por %p143, %p144
      %p146 = scmp.ne.s32.totalorder %s132, %s133
      %p147 = scmp.eq.s32.totalorder %s22, 1
      %p148 = por %p146, %p147
      %p150 = scmp.ne.s32.totalorder %s133, %s149
      %p151 = scmp.eq.s32.totalorder %s22, 0
      %p152 = por %p150, %p151
      %p153 = scmp.le.s32.totalorder 1, %s16
      %p154 = scmp.lt.s32.totalorder %s16, 3
      %p155 = pnand %p153, %p154
      %p156 = pneg %p155
      // Predicated region
      $region9: #{tpu_custom_call.1} parent=5 // pred_check
        _
      $region10: #{tpu_custom_call.1} parent=5 // pred_check_branch
        %158 = sbr.rel (%p155) target = $region12
      $region11: #{tpu_custom_call.1} parent=5 // pred_region
        %s159 = ssub.s32 %s16, 1
        // Predicated region
        $region13: #{tpu_custom_call.1} parent=11 // pred_check
          %p160 = pneg %p91
        $region14: #{tpu_custom_call.1} parent=11 // pred_check_branch
          %162 = sbr.rel (%p160) target = $region16
        $region15: #{tpu_custom_call.1} parent=11 // pred_region
          %s163 = smul.u32 4, %s28
          %s165 = ssub.s32 512, 512
          %166 = vsyncadd [#allocation7], %s165
          %s167 = sadd.s32 %s27, %s163
          %s168 = smul.addr %s167, 128
          %s169 = scalar_lea.hbm %s1, %s168
          %s170 = sshll.u32 [#allocation6], 4
          %s171 = int_to_ptr.vmem [resolvable:$true] %s170
          %176 = dma.hbm_to_vmem [thread:$0]  %s169, 512, %s171, [#allocation7], 128, 128, 8
        $region16: #{tpu_custom_call.1} parent=11 // pred_fallthru
          _
        // Predicated region
        $region17: #{tpu_custom_call.1} parent=11 // pred_check
          %p177 = pneg %p117
        $region18: #{tpu_custom_call.1} parent=11 // pred_check_branch
          %179 = sbr.rel (%p177) target = $region20
        $region19: #{tpu_custom_call.1} parent=11 // pred_region
          %p180 = scmp.lt.s32.totalorder %s27, 0
          %s181 = scalar_select %p180, %s27, 0
          %s182 = scalar_lea.vmem %s2, %s181
        $region20: #{tpu_custom_call.1} parent=11 // pred_fallthru
          _
      $region12: #{tpu_custom_call.1} parent=5 // pred_fallthru
        _
      %p183 = scmp.lt.s32.totalorder %s16, 2
      // Predicated region
      $region21: #{tpu_custom_call.1} parent=5 // pred_check
        %p184 = pneg %p183
      $region22: #{tpu_custom_call.1} parent=5 // pred_check_branch
        %186 = sbr.rel (%p184) target = $region24
      $region23: #{tpu_custom_call.1} parent=5 // pred_region
        // Predicated region
        $region25: #{tpu_custom_call.1} parent=23 // pred_check
          %p187 = pneg %p57
        $region26: #{tpu_custom_call.1} parent=23 // pred_check_branch
          %189 = sbr.rel (%p187) target = $region28
        $region27: #{tpu_custom_call.1} parent=23 // pred_region
          %s190 = sand.u32 %s47, 1
          %s191 = scalar_lea.sflag [#allocation4], %s190
          %s192 = sand.u32 %s47, 1
          %s193 = smul.addr %s192, 8
          %s194 = scalar_lea.vmem [#allocation3], %s193
          %s196 = ssub.s32 128, 128
          %197 = vsyncadd %s191, %s196
          %s198 = sadd.s32 %s25, %s23
          %s199 = smul.addr %s198, 128
          %s200 = scalar_lea.hbm %s0, %s199
          %s202 = sshll.u32 %s194, 4
          %s203 = int_to_ptr.vmem [resolvable:$true] %s202
          %205 = dma.hbm_to_vmem [thread:$0]  %s200, 128, %s203, %s191
        $region28: #{tpu_custom_call.1} parent=23 // pred_fallthru
          _
      $region24: #{tpu_custom_call.1} parent=5 // pred_fallthru
        _
      %p206 = scmp.le.s32.totalorder 1, %s16
      %p207 = scmp.lt.s32.totalorder %s16, 3
      %p208 = pnand %p206, %p207
      %p209 = pneg %p208
      // Predicated region
      $region29: #{tpu_custom_call.1} parent=5 // pred_check
        _
      $region30: #{tpu_custom_call.1} parent=5 // pred_check_branch
        %211 = sbr.rel (%p208) target = $region32
      $region31: #{tpu_custom_call.1} parent=5 // pred_region
        %s212 = ssub.s32 %s16, 1
        %s213 = sand.u32 %s50, 1
        %s214 = scalar_lea.sflag [#allocation4], %s213
        %s215 = sand.u32 %s50, 1
        %s216 = smul.addr %s215, 8
        %s217 = scalar_lea.vmem [#allocation3], %s216
        // Predicated region
        $region33: #{tpu_custom_call.1} parent=31 // pred_check
          %p218 = pneg %p63
        $region34: #{tpu_custom_call.1} parent=31 // pred_check_branch
          %220 = sbr.rel (%p218) target = $region36
        $region35: #{tpu_custom_call.1} parent=31 // pred_region
          %221 = dma.done %s214, 128
        $region36: #{tpu_custom_call.1} parent=31 // pred_fallthru
          _
        // Predicated region
        $region37: #{tpu_custom_call.1} parent=31 // pred_check
          %p222 = pneg %p91
        $region38: #{tpu_custom_call.1} parent=31 // pred_check_branch
          %224 = sbr.rel (%p222) target = $region40
        $region39: #{tpu_custom_call.1} parent=31 // pred_region
          %225 = dma.done [#allocation7], 512
        $region40: #{tpu_custom_call.1} parent=31 // pred_fallthru
          _
        %s226 = sand.u32 %s50, 1
        %s227 = scalar_lea.sflag [#allocation4], %s226
        %s228 = sand.u32 %s50, 1
        %s229 = smul.addr %s228, 8
        %s230 = scalar_lea.vmem [#allocation3], %s229
        %p231 = pneg %p63
        %p232 = pneg %p60
        %p233 = pneg %p91
        %p234 = pneg %p88
        %p235 = scmp.lt.s32.totalorder %s27, 0
        %s236 = scalar_select %p235, %s27, 0
        %s237 = scalar_lea.vmem %s2, %s236
        %p238 = pneg %p117
        %p239 = pneg %p114
        %p240 = pneg %p145
        %p241 = pneg %p142
        %s242 = sand.u32 %s132, 1
        %s243 = scalar_lea.sflag [#allocation5], %s242
        %s244 = sand.u32 %s132, 1
        %s245 = smul.addr %s244, 8
        %s246 = scalar_lea.vmem [#allocation8], %s245
        %s247 = smul.u32 4, %s28
        %p248 = scmp.lt.s32.totalorder %s27, 0
        %s249 = scalar_select %p248, %s27, 0
        %s250 = scalar_lea.vmem %s2, %s249
        %p251 = scmp.eq.s32.totalorder %s28, 0
        // Predicated region
        $region41: #{tpu_custom_call.1} parent=31 // pred_check
          %p252 = pneg %p251
        $region42: #{tpu_custom_call.1} parent=31 // pred_check_branch
          %254 = sbr.rel (%p252) target = $region44
        $region43: #{tpu_custom_call.1} parent=31 // pred_region
          %v255 = vld [vmem:[%s250] sm:$0x1]
          %v257 = vlaneseq
          %v258 = vshrl.u32 %v257, 7
          %v259 = vsub.s32 0, %v258
          %v260 = vrot.slane %v255, %v259
          %vm262 = vcmask 261120
          %263 = vst.msk [vmem:[#allocation2] sm:$0xff] %vm262, %v260
        $region44: #{tpu_custom_call.1} parent=31 // pred_fallthru
          _
        %v264 = vld [vmem:[#allocation2] sm:$0xff]
        %v265 = vld [vmem:[%s217] sm:$0xff]
        %v266 = vld [vmem:[#allocation6] sm:$0xff]
        %v267 = vld [vmem:[#allocation6 + $0x8] sm:$0xff]
        %v268 = vld [vmem:[#allocation6 + $0x10] sm:$0xff]
        %v269 = vld [vmem:[#allocation6 + $0x18] sm:$0xff]
        %vm270 = vcmask 261120
        %v272 = vsel %vm270, %v265, 0
        %274 = vmatprep.subr.mxu0 0.0
        %275 = vmatpush1.msra.mxu0 %v266
        %276 = vmatprep.subr.mxu0 0.0
        %277 = vmatpush1.msra.mxu0 %v267
        %278 = vmatprep.subr.mxu0 0.0
        %279 = vmatpush1.msra.mxu0 %v268
        %280 = vmatprep.subr.mxu0 0.0
        %281 = vmatpush1.msra.mxu0 %v269
        %282 = vmatprep.subr.mxu0 0.0
        %283 = vmatpush1.msra.mxu0 0.0
        %284 = vmatprep.subr.mxu0 0.0
        %285 = vmatpush1.msra.mxu0 0.0
        %286 = vmatprep.subr.mxu0 0.0
        %287 = vmatpush1.msra.mxu0 0.0
        %288 = vmatprep.subr.mxu0 0.0
        %289 = vmatpush1.msra.mxu0 0.0
        %290 = vmatprep.subr.mxu0 0.0
        %291 = vmatpush1.msra.mxu0 0.0
        %292 = vmatprep.subr.mxu0 0.0
        %293 = vmatpush1.msra.mxu0 0.0
        %294 = vmatprep.subr.mxu0 0.0
        %295 = vmatpush1.msra.mxu0 0.0
        %296 = vmatprep.subr.mxu0 0.0
        %297 = vmatpush1.msra.mxu0 0.0
        %298 = vmatprep.subr.mxu0 0.0
        %299 = vmatpush1.msra.mxu0 0.0
        %300 = vmatprep.subr.mxu0 0.0
        %301 = vmatpush1.msra.mxu0 0.0
        %302 = vmatprep.subr.mxu0 0.0
        %303 = vmatpush1.msra.mxu0 0.0
        %304 = vmatprep.subr.mxu0 0.0
        %305 = vmatpush1.msra.mxu0 0.0
        %306 = vmatprep.subr.mxu0 0.0
        %307 = vmatpush1.msra.mxu0 0.0
        %308 = vmatprep.subr.mxu0 0.0
        %309 = vmatpush1.msra.mxu0 0.0
        %310 = vmatprep.subr.mxu0 0.0
        %311 = vmatpush1.msra.mxu0 0.0
        %312 = vmatprep.subr.mxu0 0.0
        %313 = vmatpush1.msra.mxu0 0.0
        %314 = vmatprep.subr.mxu0 0.0
        %315 = vmatpush1.msra.mxu0 0.0
        %316 = vmatprep.subr.mxu0 0.0
        %317 = vmatpush1.msra.mxu0 0.0
        %318 = vmatprep.subr.mxu0 0.0
        %319 = vmatpush1.msra.mxu0 0.0
        %320 = vmatprep.subr.mxu0 0.0
        %321 = vmatpush1.msra.mxu0 0.0
        %322 = vmatprep.subr.mxu0 0.0
        %323 = vmatpush1.msra.mxu0 0.0
        %324 = vmatprep.subr.mxu0 0.0
        %325 = vmatpush1.msra.mxu0 0.0
        %326 = vmatprep.subr.mxu0 0.0
        %327 = vmatpush1.msra.mxu0 0.0
        %328 = vmatprep.subr.mxu0 0.0
        %329 = vmatpush1.msra.mxu0 0.0
        %330 = vmatprep.subr.mxu0 0.0
        %331 = vmatpush1.msra.mxu0 0.0
        %332 = vmatprep.subr.mxu0 0.0
        %333 = vmatpush1.msra.mxu0 0.0
        %334 = vmatprep.subr.mxu0 0.0
        %335 = vmatpush1.msra.mxu0 0.0
        %336 = vmatprep.subr.mxu0 0.0
        %337 = vmatpush1.msra.mxu0 0.0
        %338 = vmatprep.mubr.f32.mxu0 0.0
        %339 = vmatmul.mubr.f32.gmra.mrb[0].mxu0 %v272
        %v340 = vpop.f32.mrb[0].mxu0
        %v341 = vadd.f32 0.0, %v340
        %v342 = vpop.f32.mrb[0].mxu0
        %343 = vdwg.mxu0
        %v344 = vadd.f32 %v264, %v341
        %345 = vst.msk [vmem:[#allocation2] sm:$0xff] %vm270, %v344
        // Predicated region
        $region45: #{tpu_custom_call.1} parent=31 // pred_check
          %p346 = pneg %p251
        $region46: #{tpu_custom_call.1} parent=31 // pred_check_branch
          %348 = sbr.rel (%p346) target = $region48
        $region47: #{tpu_custom_call.1} parent=31 // pred_region
          %v349 = vld [vmem:[#allocation2] sm:$0xff]
          %350 = vst.msk [vmem:[%s246] sm:$0xff] %vm270, %v349
        $region48: #{tpu_custom_call.1} parent=31 // pred_fallthru
          _
        %s351 = sand.u32 %s132, 1
        %s352 = scalar_lea.sflag [#allocation5], %s351
        %s353 = sand.u32 %s132, 1
        %s354 = smul.addr %s353, 8
        %s355 = scalar_lea.vmem [#allocation8], %s354
        // Predicated region
        $region49: #{tpu_custom_call.1} parent=31 // pred_check
          %p356 = pneg %p142
        $region50: #{tpu_custom_call.1} parent=31 // pred_check_branch
          %358 = sbr.rel (%p356) target = $region52
        $region51: #{tpu_custom_call.1} parent=31 // pred_region
          %s360 = ssub.s32 128, 128
          %361 = vsyncadd %s352, %s360
          %s362 = sadd.s32 %s27, %s26
          %s363 = smul.addr %s362, 128
          %s364 = scalar_lea.hbm %s3, %s363
          %s366 = sshll.u32 %s355, 4
          %s367 = int_to_ptr.vmem [resolvable:$true] %s366
          %369 = dma.vmem_to_hbm [thread:$0]  %s367, 128, %s364, %s352
        $region52: #{tpu_custom_call.1} parent=31 // pred_fallthru
          _
      $region32: #{tpu_custom_call.1} parent=5 // pred_fallthru
        _
      %p370 = scmp.le.s32.totalorder 2, %s16
      // Predicated region
      $region53: #{tpu_custom_call.1} parent=5 // pred_check
        %p371 = pneg %p370
      $region54: #{tpu_custom_call.1} parent=5 // pred_check_branch
        %373 = sbr.rel (%p371) target = $region56
      $region55: #{tpu_custom_call.1} parent=5 // pred_region
        %s374 = ssub.s32 %s16, 2
        // Predicated region
        $region57: #{tpu_custom_call.1} parent=55 // pred_check
          %p375 = pneg %p148
        $region58: #{tpu_custom_call.1} parent=55 // pred_check_branch
          %377 = sbr.rel (%p375) target = $region60
        $region59: #{tpu_custom_call.1} parent=55 // pred_region
          %s378 = sand.u32 %s133, 1
          %s379 = scalar_lea.sflag [#allocation5], %s378
          %s380 = sand.u32 %s133, 1
          %s381 = smul.addr %s380, 8
          %s382 = scalar_lea.vmem [#allocation8], %s381
          %383 = dma.done %s379, 128
        $region60: #{tpu_custom_call.1} parent=55 // pred_fallthru
          _
      $region56: #{tpu_custom_call.1} parent=5 // pred_fallthru
        _
    $region6: #{tpu_custom_call.1} parent=1 // loop_footer
      %s20 = sadd.s32 1, %s16
    $region7: #{tpu_custom_call.1} parent=1 // loop_footer_branch
      %15 = sbr.rel target = $region3
    $region8: #{tpu_custom_call.1} parent=1 // loop_exit
      _
    %384 = vsyncpa [#allocation4], 1
    %s385 = scalar_lea.sflag [#allocation4], 1
    %386 = vsyncpa %s385, 1
    %387 = vsyncpa [#allocation7], 1
    %388 = vsyncpa [#allocation5], 1
    %s389 = scalar_lea.sflag [#allocation5], 1
    %390 = vsyncpa %s389, 1

</llo_original>
